<compile_context>
chip_gen: v5e
topology: v5e:2x2
jax: 0.10.0
libtpu: 0.0.40
codegen_flags: <defaults>
</compile_context>

<pallas_src>
import dataclasses
import functools
import math

import jax
import jax.numpy as jnp
from jax.experimental import pallas as pl
from jax.experimental.pallas import tpu as pltpu


def _round_up(x, m):
    return (x + m - 1) // m * m


def _spec(block_shape, index_map, *, single_buffered=False):
    """BlockSpec helper; requests single-buffering for constant-index blocks."""
    if single_buffered:
        try:
            return pl.BlockSpec(block_shape, index_map,
                                pipeline_mode=pl.Buffered(1))
        except Exception:  # jax build without pipeline_mode / Buffered
            pass
    return pl.BlockSpec(block_shape, index_map)


def _pad2d(a, rows, cols, dtype):
    """Cast + zero-pad to (rows, cols); both are no-ops when already matching."""
    if a.dtype != jnp.dtype(dtype):
        a = a.astype(dtype)
    pr, pc = rows - a.shape[0], cols - a.shape[1]
    if pr or pc:
        a = jnp.pad(a, ((0, pr), (0, pc)))
    return a


# ---------------------------------------------------------------------------
# Planning: tile sizes, padded shapes, VMEM budgets (shared by prepare_adj and
# the forward pass so a pre-padded adj always matches).
# ---------------------------------------------------------------------------
@dataclasses.dataclass(frozen=True)
class _Plan:
    n: int
    f_in: int
    f_out: int
    split_k: int
    k_pad: int
    f_out_pad: int
    f_tail_pad: int
    n_k: int
    tile_m: int
    n_m: int
    grid_m: int
    tile_k: int
    grid_k: int
    p1_vmem_est: int
    p2_vmem_est: int
    vmem_cap_limit: int


def _make_plan(n, f_in, f_out, compute_dtype, tile_m=None, tile_k=None):
    split_k = f_out // 10
    f_out_pad = _round_up(f_out, 128)
    k_pad = _round_up(split_k, 128) if split_k > 0 else 0
    f_tail_pad = f_out_pad - k_pad
    n_k = _round_up(n, 128)            # contraction dim (adj cols): pad to 128 only
    cd = jnp.dtype(compute_dtype).itemsize

    try:
        vmem_cap = int(pltpu.get_tpu_info().vmem_capacity_bytes)
    except Exception:
        vmem_cap = 64 << 20            # conservative (v7x per-TC size)
    # Leave >= 24 MiB headroom for compiler-internal scratch / co-resident buffers:
    # ~40 MiB cap on v7x (64 MiB/TC), ~96 MiB cap on v5e/v6e (128 MiB).
    vmem_cap_limit = max(16 << 20, min((3 * vmem_cap) // 4, vmem_cap - (24 << 20)))
    chooser_budget = (48 << 20) if vmem_cap >= (96 << 20) else (24 << 20)

    def p2_need(tm, tk):
        slab_bufs = 1 if tk == n_k else 2
        return (2 * tm * tk * cd                    # adj tiles (double-buffered)
                + slab_bufs * tk * k_pad * cd       # supk contraction slab
                + 2 * tm * k_pad * cd               # supk pass-through row tiles
                + 2 * tm * f_tail_pad * 4           # f32 tail row tiles
                + 2 * tm * f_out_pad * 4            # output tiles (<= f32)
                + tm * max(k_pad, 128) * 4          # f32 accumulator scratch
                + 2 * f_out_pad * 4)                # bias

    if tile_m is None:
        tile_m = 128
        if n > 128:
            for cand in (1024, 512, 256, 128):
                if cand > n_k:
                    continue
                waste = _round_up(n, cand) - n
                # Reject big tiles that buy themselves with padded adj rows
                # (pass 2 is HBM-BW bound; padded rows are pure wasted bytes).
                if waste > max(n // 16, 127):
                    continue
                if p2_need(cand, n_k) <= chooser_budget:
                    tile_m = cand
                    break
    if tile_m % 128:
        raise ValueError("tile_m must be a multiple of 128")
    n_m = _round_up(n, tile_m)         # n_m >= n_k always (tile_m multiple of 128)
    grid_m = n_m // tile_m

    if tile_k is None:
        tile_k = n_k
        if k_pad > 0 and p2_need(tile_m, n_k) > chooser_budget:
            # adj-column reduction split: largest 128-multiple divisor of n_k
            # that fits (keeps large graphs pipelined on v7x's 64 MiB/TC).
            blocks = n_k // 128
            tile_k = 128
            for d in range(blocks, 0, -1):
                if blocks % d == 0 and p2_need(tile_m, d * 128) <= chooser_budget:
                    tile_k = d * 128
                    break
    if (n_k % tile_k) or (tile_k % 128):
        raise ValueError(f"tile_k={tile_k} must be a 128-multiple dividing {n_k}")
    grid_k = n_k // tile_k

    p1_vmem_est = (2 * tile_m * max(f_in, 128) * cd + f_in * f_out_pad * cd
                   + 2 * tile_m * max(k_pad, 128) * cd + 2 * tile_m * f_tail_pad * 4)

    return _Plan(n, f_in, f_out, split_k, k_pad, f_out_pad, f_tail_pad, n_k,
                 tile_m, n_m, grid_m, tile_k, grid_k,
                 p1_vmem_est, p2_need(tile_m, tile_k), vmem_cap_limit)


def _params(semantics, vmem_est, cap):
    limit = None
    if vmem_est > (12 << 20):
        limit = min(int(vmem_est * 5 // 4) + (4 << 20), cap)
    return pltpu.CompilerParams(dimension_semantics=semantics,
                                vmem_limit_bytes=limit)


# ---------------------------------------------------------------------------
# Kernels
# ---------------------------------------------------------------------------
def _support_kernel(x_ref, w_ref, supk_ref, *tail_refs, k_pad, has_tail):
    # support row tile = x_tile @ W (f32 accumulation); head columns go out in
    # the MXU compute dtype (they feed the adj matmul), tail columns stay f32.
    s = jnp.dot(x_ref[...], w_ref[...], preferred_element_type=jnp.float32)
    supk_ref[...] = s[:, :k_pad].astype(supk_ref.dtype)
    if has_tail:
        tail_refs[0][...] = s[:, k_pad:]


def _mix_kernel(adj_ref, slab_ref, supk_ref, *rest,
                split_k, k_pad, has_tail, activation):
    if has_tail:
        tail_ref, b_ref, o_ref, acc_ref = rest
    else:
        tail_ref = None
        b_ref, o_ref, acc_ref = rest
    kk = pl.program_id(1)

    @pl.when(kk == 0)
    def _():
        acc_ref[...] = jnp.zeros_like(acc_ref)

    acc_ref[...] += jnp.dot(adj_ref[...], slab_ref[...],
                            preferred_element_type=jnp.float32)

    @pl.when(kk == pl.num_programs(1) - 1)
    def _():
        col = jax.lax.broadcasted_iota(jnp.int32, acc_ref.shape, 1)
        passthru = supk_ref[...].astype(jnp.float32)
        head = jnp.where(col < split_k, acc_ref[...], passthru) + b_ref[:, :k_pad]
        o_ref[:, :k_pad] = activation(head).astype(o_ref.dtype)
        if has_tail:  # static python branch
            tail = tail_ref[...] + b_ref[:, k_pad:]
            o_ref[:, k_pad:] = activation(tail).astype(o_ref.dtype)


def _dense_kernel(x_ref, w_ref, b_ref, o_ref, *, activation):
    # Degenerate F_out < 10 path: nothing goes through adj; fuse everything.
    s = jnp.dot(x_ref[...], w_ref[...], preferred_element_type=jnp.float32)
    o_ref[...] = activation(s + b_ref[...]).astype(o_ref.dtype)


# ---------------------------------------------------------------------------
# Public wrappers
# ---------------------------------------------------------------------------
def prepare_adj(adj, in_features, out_features, *,
                compute_dtype=jnp.bfloat16, tile_m=None):
    """Pre-cast / pre-pad adj once so multi-layer GCNs do not pay the N^2
    cast + pad on every forward call (adj dominates pass-2 HBM traffic)."""
    n = adj.shape[0]
    assert adj.shape == (n, n), adj.shape
    plan = _make_plan(n, in_features, out_features, compute_dtype, tile_m=tile_m)
    return _pad2d(adj, plan.n_m, plan.n_k, compute_dtype)


def zeron_gcn_forward(x, adj, weight, bias, activation=jax.nn.relu, *,
                      compute_dtype=jnp.bfloat16, tile_m=None, tile_k=None):
    """Pallas implementation of ZERON_GCN.forward(input, adj, activation).

    * `activation` must be elementwise (relu/elu/...); row-wise activations are
      not supported by the column-split kernel.
    * `compute_dtype` is the MXU input dtype (bf16 default, f32 accumulation);
      pass jnp.float32 for exact parity with the PyTorch/f32 math.
    * `adj` may be the raw (N, N) matrix or the output of `prepare_adj(...)`.
    """
    n, f_in = x.shape
    f_in_w, f_out = weight.shape
    assert f_in == f_in_w, (f_in, f_in_w)

    out_dtype = x.dtype
    out_bytes = jnp.dtype(out_dtype).itemsize
    cd_bytes = jnp.dtype(compute_dtype).itemsize

    plan = _make_plan(n, f_in, f_out, compute_dtype, tile_m=tile_m, tile_k=tile_k)
    tm, tk = plan.tile_m, plan.tile_k
    n_m, n_k = plan.n_m, plan.n_k
    split_k, k_pad = plan.split_k, plan.k_pad
    f_out_pad, f_tail_pad = plan.f_out_pad, plan.f_tail_pad
    has_tail = f_tail_pad > 0

    b = bias if bias is not None else jnp.zeros((f_out,), jnp.float32)
    b_p = _pad2d(b.reshape(1, f_out), 1, f_out_pad, jnp.float32)
    x_p = _pad2d(x, n_m, f_in, compute_dtype)
    w_p = _pad2d(weight, f_in, f_out_pad, compute_dtype)

    p1_params = _params(("parallel",), plan.p1_vmem_est, plan.vmem_cap_limit)

    # ---- degenerate case F_out < 10: single fused pass (no HBM round trip) ----
    if split_k == 0:
        out_p = pl.pallas_call(
            functools.partial(_dense_kernel, activation=activation),
            grid=(plan.grid_m,),
            in_specs=[
                _spec((tm, f_in), lambda i: (i, 0)),
                _spec((f_in, f_out_pad), lambda i: (0, 0), single_buffered=True),
                _spec((1, f_out_pad), lambda i: (0, 0), single_buffered=True),
            ],
            out_specs=pl.BlockSpec((tm, f_out_pad), lambda i: (i, 0)),
            out_shape=jax.ShapeDtypeStruct((n_m, f_out_pad), out_dtype),
            compiler_params=p1_params,
            cost_estimate=pl.CostEstimate(
                flops=2 * n_m * f_in * f_out_pad, transcendentals=0,
                bytes_accessed=(n_m * f_in * cd_bytes + f_in * f_out_pad * cd_bytes
                                + f_out_pad * 4 + n_m * f_out_pad * out_bytes)),
        )(x_p, w_p, b_p)
        return out_p[:n, :f_out]

    # ---- pass 1: support = x @ W, de-duplicated head slab + f32 tail ----
    p1_out_shape = [jax.ShapeDtypeStruct((n_m, k_pad), compute_dtype)]
    p1_out_specs = [pl.BlockSpec((tm, k_pad), lambda i: (i, 0))]
    if has_tail:
        p1_out_shape.append(jax.ShapeDtypeStruct((n_m, f_tail_pad), jnp.float32))
        p1_out_specs.append(pl.BlockSpec((tm, f_tail_pad), lambda i: (i, 0)))
    p1_out = pl.pallas_call(
        functools.partial(_support_kernel, k_pad=k_pad, has_tail=has_tail),
        grid=(plan.grid_m,),
        in_specs=[
            _spec((tm, f_in), lambda i: (i, 0)),
            _spec((f_in, f_out_pad), lambda i: (0, 0), single_buffered=True),
        ],
        out_specs=tuple(p1_out_specs),
        out_shape=tuple(p1_out_shape),
        compiler_params=p1_params,
        cost_estimate=pl.CostEstimate(
            flops=2 * n_m * f_in * f_out_pad, transcendentals=0,
            bytes_accessed=(n_m * f_in * cd_bytes + f_in * f_out_pad * cd_bytes
                            + n_m * k_pad * cd_bytes + n_m * f_tail_pad * 4)),
    )(x_p, w_p)
    supk = p1_out[0]
    tail = p1_out[1] if has_tail else None

    # ---- adj: cast/pad only when the caller did not already prepare it ----
    if adj.shape == (n, n):
        adj_p = _pad2d(adj, n_m, n_k, compute_dtype)
    elif adj.shape == (n_m, n_k):
        adj_p = adj if adj.dtype == jnp.dtype(compute_dtype) else adj.astype(compute_dtype)
    else:
        raise ValueError(f"adj shape {adj.shape} is neither ({n},{n}) nor the "
                         f"prepared ({n_m},{n_k}); use prepare_adj() with matching args")

    # ---- pass 2: stream adj, mix head columns, pass tail through, bias, act ----
    slab_reads = 1 if plan.grid_k == 1 else plan.grid_m
    p2_cost = pl.CostEstimate(
        flops=2 * n_m * n_k * k_pad + 4 * n_m * f_out_pad,
        transcendentals=0,  # TODO(synk): plumb a per-element count for gelu/tanh-style activations
        bytes_accessed=(n_m * n_k * cd_bytes
                        + slab_reads * n_k * k_pad * cd_bytes
                        + n_m * k_pad * cd_bytes
                        + n_m * f_tail_pad * 4
                        + f_out_pad * 4
                        + n_m * f_out_pad * out_bytes))

    in_specs = [
        pl.BlockSpec((tm, tk), lambda i, k: (i, k)),            # adj tile (streamed)
        _spec((tk, k_pad), lambda i, k: (k, 0),                 # supk contraction slab
              single_buffered=(plan.grid_k == 1)),
        pl.BlockSpec((tm, k_pad), lambda i, k: (i, 0)),         # supk pass-through rows
    ]
    operands = [adj_p, supk, supk]
    if has_tail:
        in_specs.append(pl.BlockSpec((tm, f_tail_pad), lambda i, k: (i, 0)))
        operands.append(tail)
    in_specs.append(_spec((1, f_out_pad), lambda i, k: (0, 0), single_buffered=True))
    operands.append(b_p)

    out_p = pl.pallas_call(
        functools.partial(_mix_kernel, split_k=split_k, k_pad=k_pad,
                          has_tail=has_tail, activation=activation),
        grid=(plan.grid_m, plan.grid_k),
        in_specs=in_specs,
        out_specs=pl.BlockSpec((tm, f_out_pad), lambda i, k: (i, 0)),
        out_shape=jax.ShapeDtypeStruct((n_m, f_out_pad), out_dtype),
        scratch_shapes=[pltpu.VMEM((tm, k_pad), jnp.float32)],
        compiler_params=_params(("parallel", "arbitrary"),
                                plan.p2_vmem_est, plan.vmem_cap_limit),
        cost_estimate=p2_cost,
    )(*operands)

    return out_p[:n, :f_out]


# ---------------------------------------------------------------------------
# Parameter init + pure-JAX reference (mirrors the PyTorch module literally)
# ---------------------------------------------------------------------------
def init_params(key, in_features, out_features):
    """Deterministic re-implementation of ZERON_GCN.reset_parameters()."""
    stdv = 6.0 / math.sqrt(out_features + in_features)
    w_key, _ = jax.random.split(key)
    weight = jax.random.uniform(w_key, (in_features, out_features),
                                dtype=jnp.float32, minval=-stdv, maxval=stdv)
    bias = jnp.zeros((out_features,), dtype=jnp.float32)  # uniform_(-0, 0) == 0
    return weight, bias


def reference_forward(x, adj, weight, bias, activation=jax.nn.relu):
    support = x @ weight
    k = support.shape[1] // 10
    out = jnp.concatenate([adj @ support[:, :k], support[:, k:]], axis=1)
    out = out + bias
    return activation(out)


if __name__ == "__main__":
    key = jax.random.PRNGKey(0)
    k1, k2, k3, k4, k5, k6 = jax.random.split(key, 6)

    # --- Test 1: small graph, resident-slab path; exact f32 and default bf16 ---
    N, F_IN, F_OUT = 64, 16, 32
    x = jax.random.normal(k1, (N, F_IN), dtype=jnp.float32)
    a = jax.random.uniform(k2, (N, N), dtype=jnp.float32)
    adj = (a + a.T) * 0.5
    adj = adj / jnp.sum(adj, axis=1, keepdims=True)
    weight, bias = init_params(k3, F_IN, F_OUT)
    ref = reference_forward(x, adj, weight, bias)

    out_f32 = jax.block_until_ready(
        zeron_gcn_forward(x, adj, weight, bias, compute_dtype=jnp.float32))
    assert out_f32.shape == (N, F_OUT)
    assert jnp.allclose(out_f32, ref, atol=1e-4, rtol=1e-4), "f32 path mismatch"

    out_bf16 = jax.block_until_ready(zeron_gcn_forward(x, adj, weight, bias))

    def _r(v):
        return v.astype(jnp.bfloat16).astype(jnp.float32)

    ref_b = reference_forward(_r(x), _r(adj), _r(weight), bias)
    assert out_bf16.shape == (N, F_OUT)
    assert jnp.allclose(out_bf16, ref_b, atol=5e-2, rtol=5e-2), "bf16 path mismatch"

    # --- Test 2: prepared (pre-cast/pre-padded) adj + forced adj-column
    #     reduction split (grid_k > 1) + pass-through tail columns ---
    N2, F_IN2, F_OUT2 = 272, 24, 192
    x2 = jax.random.normal(k4, (N2, F_IN2), dtype=jnp.float32)
    a2 = jax.random.uniform(k5, (N2, N2), dtype=jnp.float32)
    adj2 = (a2 + a2.T) * 0.5
    adj2 = adj2 / jnp.sum(adj2, axis=1, keepdims=True)
    w2, _ = init_params(k6, F_IN2, F_OUT2)
    b2 = 0.05 * jnp.arange(F_OUT2, dtype=jnp.float32)   # non-zero bias
    ref2 = reference_forward(x2, adj2, w2, b2)

    adj2_prep = prepare_adj(adj2, F_IN2, F_OUT2, compute_dtype=jnp.float32)
    out2 = jax.block_until_ready(
        zeron_gcn_forward(x2, adj2_prep, w2, b2,
                          compute_dtype=jnp.float32, tile_k=128))
    assert out2.shape == (N2, F_OUT2)
    assert jnp.allclose(out2, ref2, atol=2e-4, rtol=2e-4), "k-split path mismatch"

    print("KERNEL_OK")
</pallas_src>

<mosaic_0001>
module attributes {stable_mosaic.version = 11 : i64} {
  func.func @_support_kernel(%arg0: i32, %arg1: memref<128x16xf32, #tpu.memory_space<vmem>>, %arg2: memref<16x128xf32, #tpu.memory_space<vmem>>, %arg3: memref<128x128xf32, #tpu.memory_space<vmem>>) attributes {dimension_semantics = [#tpu.dimension_semantics<parallel>], iteration_bounds = array<i64: 1>, scalar_prefetch = 0 : i64, scratch_operands = 0 : i64, tpu.core_type = #tpu.core_type<tc>, window_params = [{transform_indices = @transform_0, window_bounds = array<i64: 128, 16>}, {pipeline_mode = #tpu.pipeline_mode<synchronous>, transform_indices = @transform_1, window_bounds = array<i64: 16, 128>}, {transform_indices = @transform_2, window_bounds = array<i64: 128, 128>}]} {
    %c0 = arith.constant 0 : index
    %c0_0 = arith.constant 0 : index
    %0 = vector.load %arg1[%c0, %c0_0] : memref<128x16xf32, #tpu.memory_space<vmem>>, vector<128x16xf32>
    %c0_1 = arith.constant 0 : index
    %c0_2 = arith.constant 0 : index
    %1 = vector.load %arg2[%c0_1, %c0_2] : memref<16x128xf32, #tpu.memory_space<vmem>>, vector<16x128xf32>
    %cst = arith.constant dense<0.000000e+00> : vector<128x128xf32>
    %2 = tpu.matmul %0, %1, %cst {dimension_numbers = #tpu.dot_dimension_numbers<[1], [0], [0], [1], [0, 0, 1, 1], [], []>} : vector<128x16xf32>, vector<16x128xf32>, vector<128x128xf32> -> vector<128x128xf32>
    %c0_3 = arith.constant 0 : index
    %c0_4 = arith.constant 0 : index
    %3 = vector.load %arg3[%c0_3, %c0_4] : memref<128x128xf32, #tpu.memory_space<vmem>>, vector<128x128xf32>
    tpu.vector_store %arg3[%c0_3, %c0_4], %2 {strides = array<i32>} : memref<128x128xf32, #tpu.memory_space<vmem>>, vector<128x128xf32>,
    return
  }
  func.func @transform_0(%arg0: i32) -> (i32, i32) {
    %c0_i32 = arith.constant 0 : i32
    %c0_i32_0 = arith.constant 0 : i32
    return %arg0, %c0_i32 : i32, i32
  }
  func.func @transform_1(%arg0: i32) -> (i32, i32) {
    %c0_i32 = arith.constant 0 : i32
    %c0_i32_0 = arith.constant 0 : i32
    %c0_i32_1 = arith.constant 0 : i32
    return %c0_i32, %c0_i32_0 : i32, i32
  }
  func.func @transform_2(%arg0: i32) -> (i32, i32) {
    %c0_i32 = arith.constant 0 : i32
    %c0_i32_0 = arith.constant 0 : i32
    return %arg0, %c0_i32 : i32, i32
  }
}

</mosaic_0001>

<llo_original>
// kernel: tpu_custom_call.1
$region0: #{tpu_custom_call.1}
  #allocation0 [shape = 'u32[]', space=smem, size = 0x4, offset = 0x4, fixed_abs, tag = 'smem constant byte address 0x4 - core index']
  #allocation1 [shape = 'u32[72,128]{1,0:T(1,128)}', space=vmem, size = 0x9000, scoped, tag = 'internal scratch']
  %s0 = inlined_call_operand.vmem [shape: f32[128,16], index: 0, kind: input, shape index: {}]
  %s1 = inlined_call_operand.vmem [shape: f32[16,128], index: 1, kind: input, shape index: {}]
  %s2 = inlined_call_operand.hbm [shape: f32[128,128], index: 2, kind: output, shape index: {}]
  %s3 = sld [smem:[#allocation0]]
  $region18: #{tpu_custom_call.1} parent=0
    _
  %s5 = ssub.s32 1, %s3
  %s6 = scalar_select 0, %s5, %s3
  $region1: #{tpu_custom_call.1} parent=0
    #allocation2 [shape = 'u8[65536]{0}', space=vmem, size = 0x10000, scoped, tag = 'output window, operand 0, single buffered']
    #allocation3 [shape = 's32[1]{0}', space=sflag, size = 0x4, scoped, tag = 'scoped memory for tpu_custom_call.1']
    %7 = vsyncpa [#allocation3], 0
    // Predicated region
    $region2: #{tpu_custom_call.1} parent=1 // pred_check
      _
    $region3: #{tpu_custom_call.1} parent=1 // pred_check_branch
      %9 = sbr.rel (0) target = $region5
    $region4: #{tpu_custom_call.1} parent=1 // pred_region
      _
    $region5: #{tpu_custom_call.1} parent=1 // pred_fallthru
      _
    // Predicated region
    $region6: #{tpu_custom_call.1} parent=1 // pred_check
      _
    $region7: #{tpu_custom_call.1} parent=1 // pred_check_branch
      %11 = sbr.rel (0) target = $region9
    $region8: #{tpu_custom_call.1} parent=1 // pred_region
      _
    $region9: #{tpu_custom_call.1} parent=1 // pred_fallthru
      _
    %v12 = vld [vmem:[%s0] sm:$0xff]
    %v13 = vld [vmem:[%s0 + $0x8] sm:$0xff]
    %v14 = vld [vmem:[%s0 + $0x10] sm:$0xff]
    %v15 = vld [vmem:[%s0 + $0x18] sm:$0xff]
    %v16 = vld [vmem:[%s0 + $0x20] sm:$0xff]
    %v17 = vld [vmem:[%s0 + $0x28] sm:$0xff]
    %v18 = vld [vmem:[%s0 + $0x30] sm:$0xff]
    %v19 = vld [vmem:[%s0 + $0x38] sm:$0xff]
    %v20 = vld [vmem:[%s0 + $0x40] sm:$0xff]
    %v21 = vld [vmem:[%s0 + $0x48] sm:$0xff]
    %v22 = vld [vmem:[%s0 + $0x50] sm:$0xff]
    %v23 = vld [vmem:[%s0 + $0x58] sm:$0xff]
    %v24 = vld [vmem:[%s0 + $0x60] sm:$0xff]
    %v25 = vld [vmem:[%s0 + $0x68] sm:$0xff]
    %v26 = vld [vmem:[%s0 + $0x70] sm:$0xff]
    %v27 = vld [vmem:[%s0 + $0x78] sm:$0xff]
    %v28 = vld [vmem:[%s1] sm:$0xff]
    %v29 = vld [vmem:[%s1 + $0x8] sm:$0xff]
    %vm30 = vcmask 130048
    %v32 = vsel %vm30, %v12, 0
    %v35 = vsel %vm30, %v13, 0
    %v38 = vsel %vm30, %v14, 0
    %v41 = vsel %vm30, %v15, 0
    %v44 = vsel %vm30, %v16, 0
    %v47 = vsel %vm30, %v17, 0
    %v50 = vsel %vm30, %v18, 0
    %v53 = vsel %vm30, %v19, 0
    %v56 = vsel %vm30, %v20, 0
    %v59 = vsel %vm30, %v21, 0
    %v62 = vsel %vm30, %v22, 0
    %v65 = vsel %vm30, %v23, 0
    %v68 = vsel %vm30, %v24, 0
    %v71 = vsel %vm30, %v25, 0
    %v74 = vsel %vm30, %v26, 0
    %v77 = vsel %vm30, %v27, 0
    %79 = vmatpush.msra.mxu0 0.0
    %80 = vmatpush.msra.mxu0 0.0
    %81 = vmatpush.msra.mxu0 0.0
    %82 = vmatpush.msra.mxu0 0.0
    %83 = vmatpush.msra.mxu0 0.0
    %84 = vmatpush.msra.mxu0 0.0
    %85 = vmatpush.msra.mxu0 0.0
    %86 = vmatpush.msra.mxu0 0.0
    %87 = vmatpush.msra.mxu0 0.0
    %88 = vmatpush.msra.mxu0 0.0
    %89 = vmatpush.msra.mxu0 0.0
    %90 = vmatpush.msra.mxu0 0.0
    %91 = vmatpush.msra.mxu0 0.0
    %92 = vmatpush.msra.mxu0 0.0
    %93 = vmatpush.msra.mxu0 %v29
    %94 = vmatpush.msra.mxu0 %v28
    %95 = vmatmul.f32.gmra.mxu0 %v32
    %v96 = vpop.f32.mrf.mxu0
    %v97 = vadd.f32 0.0, %v96
    %98 = vmatmul.f32.gmra.mxu0 %v35
    %v99 = vpop.f32.mrf.mxu0
    %v100 = vadd.f32 0.0, %v99
    %101 = vmatmul.f32.gmra.mxu0 %v38
    %v102 = vpop.f32.mrf.mxu0
    %v103 = vadd.f32 0.0, %v102
    %104 = vmatmul.f32.gmra.mxu0 %v41
    %v105 = vpop.f32.mrf.mxu0
    %v106 = vadd.f32 0.0, %v105
    %107 = vmatmul.f32.gmra.mxu0 %v44
    %v108 = vpop.f32.mrf.mxu0
    %v109 = vadd.f32 0.0, %v108
    %110 = vmatmul.f32.gmra.mxu0 %v47
    %v111 = vpop.f32.mrf.mxu0
    %v112 = vadd.f32 0.0, %v111
    %113 = vmatmul.f32.gmra.mxu0 %v50
    %v114 = vpop.f32.mrf.mxu0
    %v115 = vadd.f32 0.0, %v114
    %116 = vmatmul.f32.gmra.mxu0 %v53
    %v117 = vpop.f32.mrf.mxu0
    %v118 = vadd.f32 0.0, %v117
    %119 = vmatmul.f32.gmra.mxu0 %v56
    %v120 = vpop.f32.mrf.mxu0
    %v121 = vadd.f32 0.0, %v120
    %122 = vmatmul.f32.gmra.mxu0 %v59
    %v123 = vpop.f32.mrf.mxu0
    %v124 = vadd.f32 0.0, %v123
    %125 = vmatmul.f32.gmra.mxu0 %v62
    %v126 = vpop.f32.mrf.mxu0
    %v127 = vadd.f32 0.0, %v126
    %128 = vmatmul.f32.gmra.mxu0 %v65
    %v129 = vpop.f32.mrf.mxu0
    %v130 = vadd.f32 0.0, %v129
    %131 = vmatmul.f32.gmra.mxu0 %v68
    %v132 = vpop.f32.mrf.mxu0
    %v133 = vadd.f32 0.0, %v132
    %134 = vmatmul.f32.gmra.mxu0 %v71
    %v135 = vpop.f32.mrf.mxu0
    %v136 = vadd.f32 0.0, %v135
    %137 = vmatmul.f32.gmra.mxu0 %v74
    %v138 = vpop.f32.mrf.mxu0
    %v139 = vadd.f32 0.0, %v138
    %140 = vmatmul.f32.gmra.mxu0 %v77
    %v141 = vpop.f32.mrf.mxu0
    %v142 = vadd.f32 0.0, %v141
    %143 = vdwg.mxu0
    %144 = vst [vmem:[#allocation2] sm:$0xff] %v97
    %145 = vst [vmem:[#allocation2 + $0x8] sm:$0xff] %v100
    %146 = vst [vmem:[#allocation2 + $0x10] sm:$0xff] %v103
    %147 = vst [vmem:[#allocation2 + $0x18] sm:$0xff] %v106
    %148 = vst [vmem:[#allocation2 + $0x20] sm:$0xff] %v109
    %149 = vst [vmem:[#allocation2 + $0x28] sm:$0xff] %v112
    %150 = vst [vmem:[#allocation2 + $0x30] sm:$0xff] %v115
    %151 = vst [vmem:[#allocation2 + $0x38] sm:$0xff] %v118
    %152 = vst [vmem:[#allocation2 + $0x40] sm:$0xff] %v121
    %153 = vst [vmem:[#allocation2 + $0x48] sm:$0xff] %v124
    %154 = vst [vmem:[#allocation2 + $0x50] sm:$0xff] %v127
    %155 = vst [vmem:[#allocation2 + $0x58] sm:$0xff] %v130
    %156 = vst [vmem:[#allocation2 + $0x60] sm:$0xff] %v133
    %157 = vst [vmem:[#allocation2 + $0x68] sm:$0xff] %v136
    %158 = vst [vmem:[#allocation2 + $0x70] sm:$0xff] %v139
    %159 = vst [vmem:[#allocation2 + $0x78] sm:$0xff] %v142
    // Predicated region
    $region10: #{tpu_custom_call.1} parent=1 // pred_check
      _
    $region11: #{tpu_custom_call.1} parent=1 // pred_check_branch
      %161 = sbr.rel (0) target = $region13
    $region12: #{tpu_custom_call.1} parent=1 // pred_region
      %163 = vsyncadd [#allocation3], 0
      %s164 = sshll.u32 [#allocation2], 4
      %s165 = int_to_ptr.vmem [resolvable:$true] %s164
      %s166 = sshll.u32 %s2, 4
      %s167 = int_to_ptr.hbm [resolvable:$true] %s166
      %172 = dma.vmem_to_hbm [thread:$0]  %s165, 2048, %s167, [#allocation3], 128, 128, 8
    $region13: #{tpu_custom_call.1} parent=1 // pred_fallthru
      _
    // Predicated region
    $region14: #{tpu_custom_call.1} parent=1 // pred_check
      _
    $region15: #{tpu_custom_call.1} parent=1 // pred_check_branch
      %174 = sbr.rel (0) target = $region17
    $region16: #{tpu_custom_call.1} parent=1 // pred_region
      %176 = dma.done [#allocation3], 2048
    $region17: #{tpu_custom_call.1} parent=1 // pred_fallthru
      _
    %177 = vsyncpa [#allocation3], 1

</llo_original>
